<compile_context>
chip_gen: v6e
topology: v6e:2x2x1
jax: 0.10.0
libtpu: 0.0.40
codegen_flags: <defaults>
</compile_context>

<pallas_src>
import jax
import jax.numpy as jnp
from jax.experimental import pallas as pl
from jax.experimental.pallas import tpu as pltpu


def _hbm_copy_kernel(x_hbm_ref, o_hbm_ref, sem):
    # Single HBM->HBM DMA of the whole parameter; no VMEM staging, no grid.
    copy = pltpu.make_async_copy(x_hbm_ref, o_hbm_ref, sem)
    copy.start()
    copy.wait()


def map_dynamic_latent_variable_forward(X: jax.Array, materialize: bool = False) -> jax.Array:
    """Pallas implementation of MAPDynamicLatentVariable.forward().

    Args:
      X: the registered parameter, shape (n, horizon, latent_dim).
      materialize: if False (default), return X directly — the exact, zero-cost
        implementation of the identity forward. If True, produce a fresh HBM
        buffer holding a copy of X via a single HBM->HBM DMA kernel.

    Returns:
      The MAP estimate X (identical values, same shape/dtype).
    """
    if not materialize:
        # forward() is `return self.X`; the optimal lowering is no op at all.
        return X

    nbytes = X.size * X.dtype.itemsize
    return pl.pallas_call(
        _hbm_copy_kernel,
        out_shape=jax.ShapeDtypeStruct(X.shape, X.dtype),
        in_specs=[pl.BlockSpec(memory_space=pl.ANY)],
        out_specs=pl.BlockSpec(memory_space=pl.ANY),
        scratch_shapes=[pltpu.SemaphoreType.DMA(())],
        cost_estimate=pl.CostEstimate(
            flops=0, transcendentals=0, bytes_accessed=2 * nbytes),
        compiler_params=pltpu.CompilerParams(
            # Tiny: no tiles are staged in VMEM; only DMA descriptors/semaphore.
            vmem_limit_bytes=4 * 1024 * 1024,
        ),
    )(X)


class MAPDynamicLatentVariableJax:
    """Minimal JAX analogue of the PyTorch module.

    Holds the parameter X (initialized from X_init) and a prior description.
    forward() returns X; forward(materialize=True) returns a fresh copy of X
    produced by the Pallas HBM->HBM DMA kernel.
    """

    def __init__(self, n, horizon, latent_dim, X_init, prior_x=None):
        assert X_init.shape == (n, horizon, latent_dim)
        self.n = n
        self.horizon = horizon
        self.latent_dim = latent_dim
        self.X = X_init
        # prior_x is only used for training-time regularization; not in forward().
        self.prior_x = prior_x

    def forward(self, materialize: bool = False):
        return map_dynamic_latent_variable_forward(self.X, materialize=materialize)


if __name__ == "__main__":
    # Small shapes consistent with the module: n latent points, a horizon of
    # time steps, and a latent dimensionality.
    n, horizon, latent_dim = 8, 8, 32

    key = jax.random.PRNGKey(0)
    # Deterministic synthetic initialization of the parameter X (X_init).
    X_init = jax.random.normal(key, (n, horizon, latent_dim), dtype=jnp.float32)

    # Deterministic "prior" parameters (mean zero, identity covariance), in the
    # spirit of a MultivariateNormal prior over X. Not used in forward().
    prior_mean = jnp.zeros((latent_dim,), dtype=jnp.float32)
    prior_cov = jnp.eye(latent_dim, dtype=jnp.float32)
    prior_x = (prior_mean, prior_cov)

    module = MAPDynamicLatentVariableJax(n, horizon, latent_dim, X_init, prior_x)

    # Default path: zero-cost identity (exactly `return self.X`).
    out_fast = module.forward()
    out_fast = jax.block_until_ready(out_fast)
    assert out_fast.shape == X_init.shape
    assert out_fast.dtype == X_init.dtype
    assert bool(jnp.all(out_fast == X_init))

    # Forced-materialization path: exercises the Pallas HBM->HBM DMA kernel.
    out_copy = module.forward(materialize=True)
    out_copy = jax.block_until_ready(out_copy)
    assert out_copy.shape == X_init.shape
    assert out_copy.dtype == X_init.dtype
    assert bool(jnp.all(out_copy == X_init))

    print("KERNEL_OK")
</pallas_src>

<mosaic_0001>
module attributes {stable_mosaic.version = 11 : i64} {
  func.func @_hbm_copy_kernel(%arg0: memref<8x8x32xf32, #tpu.memory_space<any>>, %arg1: memref<8x8x32xf32, #tpu.memory_space<any>>, %arg2: memref<!tpu.dma_semaphore, #tpu.memory_space<semaphore_mem>>) attributes {dimension_semantics = [], scalar_prefetch = 0 : i64, scratch_operands = 1 : i64, tpu.core_type = #tpu.core_type<tc>} {
    tpu.enqueue_dma source(%arg0 : memref<8x8x32xf32, #tpu.memory_space<any>>) target(%arg1 : memref<8x8x32xf32, #tpu.memory_space<any>>) target_semaphore(%arg2 : memref<!tpu.dma_semaphore, #tpu.memory_space<semaphore_mem>>)
    tpu.wait_dma2 semaphore(%arg2 : memref<!tpu.dma_semaphore, #tpu.memory_space<semaphore_mem>>) src(%arg0 : memref<8x8x32xf32, #tpu.memory_space<any>>) dst(%arg1 : memref<8x8x32xf32, #tpu.memory_space<any>>)
    return
  }
}

</mosaic_0001>

<llo_original>
// kernel: tpu_custom_call.1
$region0: #{tpu_custom_call.1}
  #allocation0 [shape = 'u32[]', space=smem, size = 0x4, offset = 0x4, fixed_abs, tag = 'smem constant byte address 0x4 - core index']
  #allocation1 [shape = 'u32[144,128]{1,0:T(1,128)}', space=vmem, size = 0x12000, scoped, tag = 'internal scratch']
  #allocation2 [shape = 's32[1]{0}', space=sflag, size = 0x4, scoped, tag = 'scratch operand']
  #allocation3 [shape = 's32[]', space=sflag, size = 0x4, offset = 0, fixed_abs, tag = 'sflag constant byte address 0x0 - dummy sync flag']
  #allocation4 [shape = 'u32[0]{0}', space=smem, size = 0, offset = 0, fixed_abs, tag = 'smem constant byte address 0x0 - null']
  %s0 = inlined_call_operand.hbm [shape: f32[8,8,32], index: 0, kind: input, shape index: {}]
  %s1 = inlined_call_operand.hbm [shape: f32[8,8,32], index: 1, kind: output, shape index: {}]
  %s2 = sld [smem:[#allocation0]]
  $region2: #{tpu_custom_call.1} parent=0
    _
  %s4 = ssub.s32 1, %s2
  %s5 = scalar_select 0, %s4, %s2
  %s7 = sshll.u32 1, 14
  %s8 = sxor.u32 4294967295, %s7
  %12 = dma.general %s0, 1024, %s1, [#allocation2], 131072, [#allocation4], 0, 0
  %s13 = smul.u32 8, 8
  %s14 = smul.u32 %s13, 1
  %s15 = sshll.u32 %s14, 4
  %16 = dma.done [#allocation2], %s15
  %17 = vsyncmov [#allocation2]
  %s18 = vpop.sfrf %17
  %p19 = scmp.eq.s32.totalorder %s18, 0
  %p20 = pneg %p19
  %22 = shalt.err (%p20)

</llo_original>
